<compile_context>
chip_gen: v7x
topology: tpu7x:2x2x1
jax: 0.10.0
libtpu: 0.0.40
codegen_flags: <defaults>
</compile_context>

<pallas_src>
import inspect

import jax
import jax.numpy as jnp
from jax.experimental import pallas as pl
from jax.experimental.pallas import tpu as pltpu

GELU_C = 0.7978845608028654  # sqrt(2 / pi)


def _round_up(x, m):
    return (x + m - 1) // m * m


# pipeline_mode=pl.Buffered(1) for constant-index operands (guarded so the
# script still runs on builds without the kwarg).
try:
    _HAS_BUFFERED = hasattr(pl, "Buffered") and (
        "pipeline_mode" in inspect.signature(pl.BlockSpec).parameters)
except (TypeError, ValueError):  # pragma: no cover
    _HAS_BUFFERED = False


def _const_spec(block_shape):
    """BlockSpec for an operand whose block index never changes (weights /
    biases). Single-buffered when supported: one VMEM copy, no re-DMA."""
    index_map = lambda *_: (0,) * len(block_shape)
    if _HAS_BUFFERED:
        return pl.BlockSpec(block_shape, index_map, pipeline_mode=pl.Buffered(1))
    return pl.BlockSpec(block_shape, index_map)


def _gelu_tanh(h):
    # tanh-approximation GELU in f32 (matches the module's custom GELU; f32
    # elementwise math is safe on v5e which has no bf16 VPU/EUP).
    return 0.5 * h * (1.0 + jnp.tanh(GELU_C * (h + 0.044715 * h * h * h)))


# -----------------------------------------------------------------------------
# Fused kernel: full W1 / W2 resident in VMEM, hidden activation never leaves
# VMEM.   o = (gelu_tanh(x @ W1 + b1)) @ W2 + b2
# -----------------------------------------------------------------------------
def _mlp_kernel_fused(x_ref, w1_ref, b1_ref, w2_ref, b2_ref, o_ref):
    h = jnp.dot(x_ref[...], w1_ref[...], preferred_element_type=jnp.float32)
    h = _gelu_tanh(h + b1_ref[...])
    y = jnp.dot(h.astype(w2_ref.dtype), w2_ref[...],
                preferred_element_type=jnp.float32) + b2_ref[...]
    o_ref[...] = y.astype(o_ref.dtype)


# -----------------------------------------------------------------------------
# Hidden-dim-tiled kernel (large hidden_features): grid = (row tiles, k tiles),
# W1 column-blocks and W2 row-blocks streamed, f32 accumulator in VMEM scratch.
# Correct because GELU is elementwise over the hidden dimension.
# -----------------------------------------------------------------------------
def _mlp_kernel_ktiled(x_ref, w1_ref, b1_ref, w2_ref, b2_ref, o_ref, acc_ref):
    k = pl.program_id(1)

    @pl.when(k == 0)
    def _():
        acc_ref[...] = jnp.zeros_like(acc_ref)

    h = jnp.dot(x_ref[...], w1_ref[...], preferred_element_type=jnp.float32)
    h = _gelu_tanh(h + b1_ref[...])
    acc_ref[...] += jnp.dot(h.astype(w2_ref.dtype), w2_ref[...],
                            preferred_element_type=jnp.float32)

    @pl.when(k == pl.num_programs(1) - 1)
    def _():
        o_ref[...] = (acc_ref[...] + b2_ref[...]).astype(o_ref.dtype)


# -----------------------------------------------------------------------------
# Wrapper
# -----------------------------------------------------------------------------
def mlp_forward(x, w1, b1, w2, b2, *, tile_m=256, tile_h=512,
                force_hidden_tiling=False):
    """Fused MLP over the last axis of x (any leading shape).

    tile_m: row-tile size. 256 is the v7x-safe default (64 MiB VMEM, 256-wide
            MXU); 512 is better on v5e/v6e (128 MiB VMEM) for large M.
    tile_h: hidden-dim tile (multiple of 128) for the streamed-weights path.
    """
    orig_shape = x.shape
    d_in = orig_shape[-1]
    d_hid = w1.shape[1]
    d_out = w2.shape[1]
    out_dtype = x.dtype

    # ---- dtype / layout prep (cheap XLA pre-pass) --------------------------
    mm_dtype = jnp.bfloat16                 # MXU-native; f32 accumulation.
    x2 = x.reshape(-1, d_in).astype(mm_dtype)
    M = x2.shape[0]
    w1c = w1.astype(mm_dtype)
    w2c = w2.astype(mm_dtype)
    b1c = b1.reshape(1, d_hid).astype(jnp.float32)
    b2c = b2.reshape(1, d_out).astype(jnp.float32)

    # Lane-dense output: pad out_features to a multiple of 128 so stores are
    # full-width vst's (padded columns are exactly zero; sliced off below).
    d_out_p = _round_up(max(d_out, 128), 128)
    if d_out_p != d_out:
        w2c = jnp.pad(w2c, ((0, 0), (0, d_out_p - d_out)))
        b2c = jnp.pad(b2c, ((0, 0), (0, d_out_p - d_out)))

    # ---- row tiling ---------------------------------------------------------
    if M <= tile_m:
        if M >= 256:
            # Split mid-size batches into >=2 parallel row tiles so both v7x
            # TensorCores get work (no effect on single-TC v5e/v6e).
            tm = _round_up((M + 1) // 2, 8)
        else:
            tm = max(8, _round_up(M, 8))
    else:
        tm = tile_m
    Mp = _round_up(M, tm)
    if Mp != M:
        x2 = jnp.pad(x2, ((0, Mp - M), (0, 0)))

    out_bytes = jnp.dtype(out_dtype).itemsize

    # ---- choose fused (weights resident) vs hidden-tiled path ---------------
    w_bytes = 2 * (d_in * d_hid + d_hid * d_out_p)            # bf16 weights
    fused_est = (w_bytes                                       # W1+W2, 1-buf
                 + 2 * tm * d_in * 2                           # x tiles, 2-buf
                 + 2 * tm * d_out_p * out_bytes                # out tiles, 2-buf
                 + tm * d_hid * (4 + 2)                        # hidden f32+bf16
                 + 8 * _round_up(d_hid, 128) * 4               # b1 (padded)
                 + 8 * d_out_p * 4)                            # b2 (padded)
    VMEM_BUDGET = 40 * 1024 * 1024
    use_ktiled = force_hidden_tiling or fused_est > VMEM_BUDGET

    if not use_ktiled:
        vmem_limit = int(min(max(2 * fused_est + (4 << 20), 32 << 20), 56 << 20))
        out = pl.pallas_call(
            _mlp_kernel_fused,
            out_shape=jax.ShapeDtypeStruct((Mp, d_out_p), out_dtype),
            grid_spec=pltpu.PrefetchScalarGridSpec(
                num_scalar_prefetch=0,
                grid=(Mp // tm,),
                in_specs=[
                    pl.BlockSpec((tm, d_in), lambda i: (i, 0)),   # x row tile
                    _const_spec((d_in, d_hid)),                   # W1 resident
                    _const_spec((1, d_hid)),                      # b1
                    _const_spec((d_hid, d_out_p)),                # W2 resident
                    _const_spec((1, d_out_p)),                    # b2
                ],
                out_specs=pl.BlockSpec((tm, d_out_p), lambda i: (i, 0)),
            ),
            compiler_params=pltpu.CompilerParams(
                dimension_semantics=("parallel",),
                vmem_limit_bytes=vmem_limit),
        )(x2, w1c, b1c, w2c, b2c)
    else:
        th = _round_up(min(tile_h, _round_up(d_hid, 128)), 128)
        d_hid_p = _round_up(d_hid, th)
        if d_hid_p != d_hid:
            # Zero-padded hidden columns: gelu(0) == 0 and the padded W2 rows
            # are zero, so they contribute nothing.
            w1c = jnp.pad(w1c, ((0, 0), (0, d_hid_p - d_hid)))
            b1c = jnp.pad(b1c, ((0, 0), (0, d_hid_p - d_hid)))
            w2c = jnp.pad(w2c, ((0, d_hid_p - d_hid), (0, 0)))

        ktiled_est = (2 * d_in * th * 2                        # W1 blocks, 2-buf
                      + 2 * th * d_out_p * 2                   # W2 blocks, 2-buf
                      + 2 * tm * d_in * 2                      # x tiles
                      + 2 * tm * d_out_p * out_bytes           # out tiles
                      + tm * d_out_p * 4                       # f32 accumulator
                      + tm * th * (4 + 2)                      # hidden temp
                      + 2 * 8 * th * 4 + 8 * d_out_p * 4)      # biases
        vmem_limit = int(min(max(2 * ktiled_est + (4 << 20), 32 << 20), 56 << 20))

        out = pl.pallas_call(
            _mlp_kernel_ktiled,
            out_shape=jax.ShapeDtypeStruct((Mp, d_out_p), out_dtype),
            grid_spec=pltpu.PrefetchScalarGridSpec(
                num_scalar_prefetch=0,
                grid=(Mp // tm, d_hid_p // th),
                in_specs=[
                    pl.BlockSpec((tm, d_in), lambda i, k: (i, 0)),   # x row tile
                    pl.BlockSpec((d_in, th), lambda i, k: (0, k)),   # W1 col block
                    pl.BlockSpec((1, th), lambda i, k: (0, k)),      # b1 slice
                    pl.BlockSpec((th, d_out_p), lambda i, k: (k, 0)),  # W2 row block
                    _const_spec((1, d_out_p)),                       # b2
                ],
                out_specs=pl.BlockSpec((tm, d_out_p), lambda i, k: (i, 0)),
                scratch_shapes=[pltpu.VMEM((tm, d_out_p), jnp.float32)],
            ),
            compiler_params=pltpu.CompilerParams(
                dimension_semantics=("parallel", "arbitrary"),
                vmem_limit_bytes=vmem_limit),
        )(x2, w1c, b1c, w2c, b2c)

    return out[:M, :d_out].reshape(*orig_shape[:-1], d_out)


# -----------------------------------------------------------------------------
# Pure-JAX reference (mirrors the PyTorch Mlp forward) for verification.
# -----------------------------------------------------------------------------
def mlp_reference(x, w1, b1, w2, b2):
    h = x @ w1 + b1
    h = 0.5 * h * (1.0 + jnp.tanh(GELU_C * (h + 0.044715 * jnp.power(h, 3))))
    return h @ w2 + b2


if __name__ == "__main__":
    key = jax.random.PRNGKey(0)
    kx, k1, kb1, k2, kb2, kx2, k3, kb3, k4, kb4 = jax.random.split(key, 10)

    # ---- Test 1: tiny shapes through the fused (weights-resident) path ------
    B, N = 2, 8
    d_in, d_hid, d_out = 32, 64, 32
    x = jax.random.normal(kx, (B, N, d_in), jnp.float32)
    w1 = 0.05 * jax.random.normal(k1, (d_in, d_hid), jnp.float32)
    b1 = 0.05 * jax.random.normal(kb1, (d_hid,), jnp.float32)
    w2 = 0.05 * jax.random.normal(k2, (d_hid, d_out), jnp.float32)
    b2 = 0.05 * jax.random.normal(kb2, (d_out,), jnp.float32)

    out1 = jax.block_until_ready(jax.jit(mlp_forward)(x, w1, b1, w2, b2))
    assert out1.shape == (B, N, d_out), out1.shape
    assert bool(jnp.all(jnp.isfinite(out1)))
    ref1 = mlp_reference(x, w1, b1, w2, b2)
    # bf16 matmul inputs with f32 accumulation -> loosened tolerance.
    assert jnp.allclose(out1, ref1, atol=2e-2, rtol=2e-2), \
        float(jnp.max(jnp.abs(out1 - ref1)))

    # ---- Test 2: larger M + non-128-multiple hidden through the streamed
    #              (hidden-dim-tiled, accumulator) path -----------------------
    B2, N2 = 2, 300
    d_hid2 = 192                      # padded to 256 -> two k-steps at th=128
    x2 = jax.random.normal(kx2, (B2, N2, d_in), jnp.float32)
    w3 = 0.05 * jax.random.normal(k3, (d_in, d_hid2), jnp.float32)
    b3 = 0.05 * jax.random.normal(kb3, (d_hid2,), jnp.float32)
    w4 = 0.05 * jax.random.normal(k4, (d_hid2, d_out), jnp.float32)
    b4 = 0.05 * jax.random.normal(kb4, (d_out,), jnp.float32)

    fwd2 = jax.jit(lambda *a: mlp_forward(*a, tile_h=128, force_hidden_tiling=True))
    out2 = jax.block_until_ready(fwd2(x2, w3, b3, w4, b4))
    assert out2.shape == (B2, N2, d_out), out2.shape
    assert bool(jnp.all(jnp.isfinite(out2)))
    ref2 = mlp_reference(x2, w3, b3, w4, b4)
    assert jnp.allclose(out2, ref2, atol=2e-2, rtol=2e-2), \
        float(jnp.max(jnp.abs(out2 - ref2)))

    print("KERNEL_OK")
</pallas_src>

<mosaic_0001>
module attributes {stable_mosaic.version = 11 : i64} {
  func.func @_mlp_kernel_fused(%arg0: i32, %arg1: memref<16x32xbf16, #tpu.memory_space<vmem>>, %arg2: memref<32x64xbf16, #tpu.memory_space<vmem>>, %arg3: memref<1x64xf32, #tpu.memory_space<vmem>>, %arg4: memref<64x128xbf16, #tpu.memory_space<vmem>>, %arg5: memref<1x128xf32, #tpu.memory_space<vmem>>, %arg6: memref<16x128xf32, #tpu.memory_space<vmem>>) attributes {dimension_semantics = [#tpu.dimension_semantics<parallel>], iteration_bounds = array<i64: 1>, scalar_prefetch = 0 : i64, scratch_operands = 0 : i64, tpu.core_type = #tpu.core_type<tc>, window_params = [{transform_indices = @transform_0, window_bounds = array<i64: 16, 32>}, {pipeline_mode = #tpu.pipeline_mode<synchronous>, transform_indices = @transform_1, window_bounds = array<i64: 32, 64>}, {pipeline_mode = #tpu.pipeline_mode<synchronous>, transform_indices = @transform_2, window_bounds = array<i64: 1, 64>}, {pipeline_mode = #tpu.pipeline_mode<synchronous>, transform_indices = @transform_3, window_bounds = array<i64: 64, 128>}, {pipeline_mode = #tpu.pipeline_mode<synchronous>, transform_indices = @transform_4, window_bounds = array<i64: 1, 128>}, {transform_indices = @transform_5, window_bounds = array<i64: 16, 128>}]} {
    %c0 = arith.constant 0 : index
    %c0_0 = arith.constant 0 : index
    %0 = vector.load %arg1[%c0, %c0_0] : memref<16x32xbf16, #tpu.memory_space<vmem>>, vector<16x32xbf16>
    %c0_1 = arith.constant 0 : index
    %c0_2 = arith.constant 0 : index
    %1 = vector.load %arg2[%c0_1, %c0_2] : memref<32x64xbf16, #tpu.memory_space<vmem>>, vector<32x64xbf16>
    %cst = arith.constant dense<0.000000e+00> : vector<16x64xf32>
    %2 = tpu.matmul %0, %1, %cst {dimension_numbers = #tpu.dot_dimension_numbers<[1], [0], [0], [1], [0, 0, 1, 1], [], []>} : vector<16x32xbf16>, vector<32x64xbf16>, vector<16x64xf32> -> vector<16x64xf32>
    %c0_3 = arith.constant 0 : index
    %c0_4 = arith.constant 0 : index
    %3 = vector.load %arg3[%c0_3, %c0_4] : memref<1x64xf32, #tpu.memory_space<vmem>>, vector<1x64xf32>
    %4 = vector.broadcast %3 : vector<1x64xf32> to vector<16x64xf32>
    %5 = arith.addf %2, %4 : vector<16x64xf32>
    %cst_5 = arith.constant 5.000000e-01 : f32
    %6 = vector.broadcast %cst_5 : f32 to vector<16x64xf32>
    %7 = arith.mulf %6, %5 : vector<16x64xf32>
    %cst_6 = arith.constant 4.471500e-02 : f32
    %8 = vector.broadcast %cst_6 : f32 to vector<16x64xf32>
    %9 = arith.mulf %8, %5 : vector<16x64xf32>
    %10 = arith.mulf %9, %5 : vector<16x64xf32>
    %11 = arith.mulf %10, %5 : vector<16x64xf32>
    %12 = arith.addf %5, %11 : vector<16x64xf32>
    %cst_7 = arith.constant 0.797884583 : f32
    %13 = vector.broadcast %cst_7 : f32 to vector<16x64xf32>
    %14 = arith.mulf %13, %12 : vector<16x64xf32>
    %15 = math.tanh %14 : vector<16x64xf32>
    %cst_8 = arith.constant 1.000000e+00 : f32
    %16 = vector.broadcast %cst_8 : f32 to vector<16x64xf32>
    %17 = arith.addf %16, %15 : vector<16x64xf32>
    %18 = arith.mulf %7, %17 : vector<16x64xf32>
    %19 = arith.truncf %18 : vector<16x64xf32> to vector<16x64xbf16>
    %c0_9 = arith.constant 0 : index
    %c0_10 = arith.constant 0 : index
    %20 = vector.load %arg4[%c0_9, %c0_10] : memref<64x128xbf16, #tpu.memory_space<vmem>>, vector<64x128xbf16>
    %cst_11 = arith.constant dense<0.000000e+00> : vector<16x128xf32>
    %21 = tpu.matmul %19, %20, %cst_11 {dimension_numbers = #tpu.dot_dimension_numbers<[1], [0], [0], [1], [0, 0, 1, 1], [], []>} : vector<16x64xbf16>, vector<64x128xbf16>, vector<16x128xf32> -> vector<16x128xf32>
    %c0_12 = arith.constant 0 : index
    %c0_13 = arith.constant 0 : index
    %22 = vector.load %arg5[%c0_12, %c0_13] : memref<1x128xf32, #tpu.memory_space<vmem>>, vector<1x128xf32>
    %23 = vector.broadcast %22 : vector<1x128xf32> to vector<16x128xf32>
    %24 = arith.addf %21, %23 : vector<16x128xf32>
    %c0_14 = arith.constant 0 : index
    %c0_15 = arith.constant 0 : index
    %25 = vector.load %arg6[%c0_14, %c0_15] : memref<16x128xf32, #tpu.memory_space<vmem>>, vector<16x128xf32>
    tpu.vector_store %arg6[%c0_14, %c0_15], %24 {strides = array<i32>} : memref<16x128xf32, #tpu.memory_space<vmem>>, vector<16x128xf32>,
    return
  }
  func.func @transform_0(%arg0: i32) -> (i32, i32) {
    %c0_i32 = arith.constant 0 : i32
    %c0_i32_0 = arith.constant 0 : i32
    return %arg0, %c0_i32 : i32, i32
  }
  func.func @transform_1(%arg0: i32) -> (i32, i32) {
    %c0_i32 = arith.constant 0 : i32
    %c0_i32_0 = arith.constant 0 : i32
    %c0_i32_1 = arith.constant 0 : i32
    return %c0_i32, %c0_i32_0 : i32, i32
  }
  func.func @transform_2(%arg0: i32) -> (i32, i32) {
    %c0_i32 = arith.constant 0 : i32
    %c0_i32_0 = arith.constant 0 : i32
    %c0_i32_1 = arith.constant 0 : i32
    return %c0_i32, %c0_i32_0 : i32, i32
  }
  func.func @transform_3(%arg0: i32) -> (i32, i32) {
    %c0_i32 = arith.constant 0 : i32
    %c0_i32_0 = arith.constant 0 : i32
    %c0_i32_1 = arith.constant 0 : i32
    return %c0_i32, %c0_i32_0 : i32, i32
  }
  func.func @transform_4(%arg0: i32) -> (i32, i32) {
    %c0_i32 = arith.constant 0 : i32
    %c0_i32_0 = arith.constant 0 : i32
    %c0_i32_1 = arith.constant 0 : i32
    return %c0_i32, %c0_i32_0 : i32, i32
  }
  func.func @transform_5(%arg0: i32) -> (i32, i32) {
    %c0_i32 = arith.constant 0 : i32
    %c0_i32_0 = arith.constant 0 : i32
    return %arg0, %c0_i32 : i32, i32
  }
}

</mosaic_0001>

<llo_original>
// kernel: mlp_forward.1
$region0: #{mlp_forward.1}
  #allocation0 [shape = 'u32[]', space=smem, size = 0x4, offset = 0x4, fixed_abs, tag = 'smem constant byte address 0x4 - core index']
  #allocation1 [shape = 'u32[144,128]{1,0:T(1,128)}', space=vmem, size = 0x12000, scoped, tag = 'internal scratch']
  %s0 = inlined_call_operand.vmem [shape: bf16[16,32], index: 0, kind: input, shape index: {}]
  %s1 = inlined_call_operand.vmem [shape: bf16[32,64], index: 1, kind: input, shape index: {}]
  %s2 = inlined_call_operand.vmem [shape: f32[1,64], index: 2, kind: input, shape index: {}]
  %s3 = inlined_call_operand.vmem [shape: bf16[64,128], index: 3, kind: input, shape index: {}]
  %s4 = inlined_call_operand.vmem [shape: f32[1,128], index: 4, kind: input, shape index: {}]
  %s5 = inlined_call_operand.vmem [shape: f32[16,128], index: 5, kind: output, shape index: {}]
  %s6 = sld [smem:[#allocation0]]
  $region30: #{mlp_forward.1} parent=0
    _
  %s8 = ssub.s32 1, %s6
  %s9 = scalar_select 0, %s8, %s6
  // Predicated region
  $region2: #{mlp_forward.1} parent=0 // pred_check
    _
  $region3: #{mlp_forward.1} parent=0 // pred_check_branch
    %11 = sbr.rel (0) target = $region5
  $region4: #{mlp_forward.1} parent=0 // pred_region
    _
  $region5: #{mlp_forward.1} parent=0 // pred_fallthru
    _
  // Predicated region
  $region6: #{mlp_forward.1} parent=0 // pred_check
    _
  $region7: #{mlp_forward.1} parent=0 // pred_check_branch
    %13 = sbr.rel (0) target = $region9
  $region8: #{mlp_forward.1} parent=0 // pred_region
    _
  $region9: #{mlp_forward.1} parent=0 // pred_fallthru
    _
  // Predicated region
  $region10: #{mlp_forward.1} parent=0 // pred_check
    _
  $region11: #{mlp_forward.1} parent=0 // pred_check_branch
    %15 = sbr.rel (0) target = $region13
  $region12: #{mlp_forward.1} parent=0 // pred_region
    _
  $region13: #{mlp_forward.1} parent=0 // pred_fallthru
    _
  // Predicated region
  $region14: #{mlp_forward.1} parent=0 // pred_check
    _
  $region15: #{mlp_forward.1} parent=0 // pred_check_branch
    %17 = sbr.rel (0) target = $region17
  $region16: #{mlp_forward.1} parent=0 // pred_region
    _
  $region17: #{mlp_forward.1} parent=0 // pred_fallthru
    _
  // Predicated region
  $region18: #{mlp_forward.1} parent=0 // pred_check
    _
  $region19: #{mlp_forward.1} parent=0 // pred_check_branch
    %19 = sbr.rel (0) target = $region21
  $region20: #{mlp_forward.1} parent=0 // pred_region
    _
  $region21: #{mlp_forward.1} parent=0 // pred_fallthru
    _
  %v21 = vld [vmem:[%s0] sm:$0xf]
  %v22 = vld [vmem:[%s0 + $0x4] sm:$0xf]
  %v23 = vld [vmem:[%s1] sm:$0xf]
  %v24 = vld [vmem:[%s1 + $0x4] sm:$0xf]
  %v25 = vld [vmem:[%s1 + $0x8] sm:$0xf]
  %v26 = vld [vmem:[%s1 + $0xc] sm:$0xf]
  %v27 = vld [vmem:[%s2] sm:$0x1]
  %v29 = vlaneseq
  %v30 = vshrl.u32 %v29, 7
  %v31 = vsub.s32 0, %v30
  %v32 = vrot.slane %v27, %v31
  %v36 = vunpack.c.l.b16 %v21
  %v37 = vunpack.c.l.b16 %v22
  %v38 = vpack.c.b16 %v37, %v36
  %v43 = vunpack.c.l.b16 %v23
  %v44 = vunpack.c.l.b16 %v24
  %v45 = vunpack.c.l.b16 %v25
  %v46 = vunpack.c.l.b16 %v26
  %v47 = vpack.c.b16 %v44, %v43
  %v48 = vpack.c.b16 %v46, %v45
  %vm51 = vcmask 261120
  %v53 = vsel %vm51, %v38, 0
  %55 = vmatprep.subr.bf16.mxu0 0
  %56 = vmatpush1.bf16.msra.mxu0 %v47
  %57 = vmatprep.subr.bf16.mxu0 0
  %58 = vmatpush1.bf16.msra.mxu0 %v48
  %59 = vmatprep.subr.bf16.mxu0 0
  %60 = vmatpush1.bf16.msra.mxu0 0
  %61 = vmatprep.subr.bf16.mxu0 0
  %62 = vmatpush1.bf16.msra.mxu0 0
  %63 = vmatprep.subr.bf16.mxu0 0
  %64 = vmatpush1.bf16.msra.mxu0 0
  %65 = vmatprep.subr.bf16.mxu0 0
  %66 = vmatpush1.bf16.msra.mxu0 0
  %67 = vmatprep.subr.bf16.mxu0 0
  %68 = vmatpush1.bf16.msra.mxu0 0
  %69 = vmatprep.subr.bf16.mxu0 0
  %70 = vmatpush1.bf16.msra.mxu0 0
  %71 = vmatprep.subr.bf16.mxu0 0
  %72 = vmatpush1.bf16.msra.mxu0 0
  %73 = vmatprep.subr.bf16.mxu0 0
  %74 = vmatpush1.bf16.msra.mxu0 0
  %75 = vmatprep.subr.bf16.mxu0 0
  %76 = vmatpush1.bf16.msra.mxu0 0
  %77 = vmatprep.subr.bf16.mxu0 0
  %78 = vmatpush1.bf16.msra.mxu0 0
  %79 = vmatprep.subr.bf16.mxu0 0
  %80 = vmatpush1.bf16.msra.mxu0 0
  %81 = vmatprep.subr.bf16.mxu0 0
  %82 = vmatpush1.bf16.msra.mxu0 0
  %83 = vmatprep.subr.bf16.mxu0 0
  %84 = vmatpush1.bf16.msra.mxu0 0
  %85 = vmatprep.subr.bf16.mxu0 0
  %86 = vmatpush1.bf16.msra.mxu0 0
  %87 = vmatprep.mubr.bf16.mxu0 0
  %88 = vmatmul.mubr.bf16.gmra.mrb[0].mxu0 %v53
  %v89 = vpop.f32.mrb[0].mxu0
  %v90 = vadd.f32 %v32, %v89
  %v91 = vpop.f32.mrb[0].mxu0
  %v92 = vpop.f32.mrb[0].mxu0
  %v93 = vadd.f32 %v32, %v92
  %v94 = vpop.f32.mrb[0].mxu0
  %95 = vdwg.mxu0
  %v96 = vmul.f32 %v90, 0.5
  %v97 = vmul.f32 %v93, 0.5
  %v98 = vmul.f32 %v90, 0.044715
  %v99 = vmul.f32 %v93, 0.044715
  %v100 = vmul.f32 %v98, %v90
  %v101 = vmul.f32 %v99, %v93
  %v102 = vmul.f32 %v100, %v90
  %v103 = vmul.f32 %v101, %v93
  %v104 = vadd.f32 %v90, %v102
  %v105 = vadd.f32 %v93, %v103
  %v106 = vmul.f32 %v104, 0.7978846
  %v107 = vmul.f32 %v105, 0.7978846
  %v108 = vtanh.pop %v106
  %v109 = vtanh.pop %v107
  %v110 = vadd.f32 %v108, 1.0
  %v111 = vadd.f32 %v109, 1.0
  %v112 = vmul.f32 %v96, %v110
  %v113 = vmul.f32 %v97, %v111
  %v114 = vpack.c.bf16 %v113, %v112
  %v115 = vld [vmem:[%s3] sm:$0xf]
  %v116 = vld [vmem:[%s3 + $0x4] sm:$0xf]
  %v117 = vld [vmem:[%s3 + $0x8] sm:$0xf]
  %v118 = vld [vmem:[%s3 + $0xc] sm:$0xf]
  %v119 = vld [vmem:[%s3 + $0x10] sm:$0xf]
  %v120 = vld [vmem:[%s3 + $0x14] sm:$0xf]
  %v121 = vld [vmem:[%s3 + $0x18] sm:$0xf]
  %v122 = vld [vmem:[%s3 + $0x1c] sm:$0xf]
  %v123 = vld [vmem:[%s4] sm:$0x1]
  %v125 = vlaneseq
  %v126 = vshrl.u32 %v125, 7
  %v127 = vsub.s32 0, %v126
  %v128 = vrot.slane %v123, %v127
  %v138 = vunpack.c.l.b16 %v115
  %v139 = vunpack.c.l.b16 %v116
  %v140 = vunpack.c.l.b16 %v117
  %v141 = vunpack.c.l.b16 %v118
  %v142 = vunpack.c.l.b16 %v119
  %v143 = vunpack.c.l.b16 %v120
  %v144 = vunpack.c.l.b16 %v121
  %v145 = vunpack.c.l.b16 %v122
  %v146 = vpack.c.b16 %v139, %v138
  %v147 = vpack.c.b16 %v141, %v140
  %v148 = vpack.c.b16 %v143, %v142
  %v149 = vpack.c.b16 %v145, %v144
  %vm154 = vcmask 523264
  %v156 = vsel %vm154, %v114, 0
  %158 = vmatprep.subr.bf16.mxu0 0
  %159 = vmatpush1.bf16.msra.mxu0 %v146
  %160 = vmatprep.subr.bf16.mxu0 0
  %161 = vmatpush1.bf16.msra.mxu0 %v147
  %162 = vmatprep.subr.bf16.mxu0 0
  %163 = vmatpush1.bf16.msra.mxu0 %v148
  %164 = vmatprep.subr.bf16.mxu0 0
  %165 = vmatpush1.bf16.msra.mxu0 %v149
  %166 = vmatprep.subr.bf16.mxu0 0
  %167 = vmatpush1.bf16.msra.mxu0 0
  %168 = vmatprep.subr.bf16.mxu0 0
  %169 = vmatpush1.bf16.msra.mxu0 0
  %170 = vmatprep.subr.bf16.mxu0 0
  %171 = vmatpush1.bf16.msra.mxu0 0
  %172 = vmatprep.subr.bf16.mxu0 0
  %173 = vmatpush1.bf16.msra.mxu0 0
  %174 = vmatprep.subr.bf16.mxu0 0
  %175 = vmatpush1.bf16.msra.mxu0 0
  %176 = vmatprep.subr.bf16.mxu0 0
  %177 = vmatpush1.bf16.msra.mxu0 0
  %178 = vmatprep.subr.bf16.mxu0 0
  %179 = vmatpush1.bf16.msra.mxu0 0
  %180 = vmatprep.subr.bf16.mxu0 0
  %181 = vmatpush1.bf16.msra.mxu0 0
  %182 = vmatprep.subr.bf16.mxu0 0
  %183 = vmatpush1.bf16.msra.mxu0 0
  %184 = vmatprep.subr.bf16.mxu0 0
  %185 = vmatpush1.bf16.msra.mxu0 0
  %186 = vmatprep.subr.bf16.mxu0 0
  %187 = vmatpush1.bf16.msra.mxu0 0
  %188 = vmatprep.subr.bf16.mxu0 0
  %189 = vmatpush1.bf16.msra.mxu0 0
  %190 = vmatprep.mubr.bf16.mxu0 0
  %191 = vmatmul.mubr.bf16.gmra.mrb[0].mxu0 %v156
  %v192 = vpop.f32.mrb[0].mxu0
  %v193 = vadd.f32 %v128, %v192
  %v194 = vpop.f32.mrb[0].mxu0
  %v195 = vpop.f32.mrb[0].mxu0
  %v196 = vadd.f32 %v128, %v195
  %v197 = vpop.f32.mrb[0].mxu0
  %198 = vdwg.mxu0
  %199 = vst [vmem:[%s5] sm:$0xff] %v193
  %200 = vst [vmem:[%s5 + $0x8] sm:$0xff] %v196
  // Predicated region
  $region22: #{mlp_forward.1} parent=0 // pred_check
    _
  $region23: #{mlp_forward.1} parent=0 // pred_check_branch
    %202 = sbr.rel (0) target = $region25
  $region24: #{mlp_forward.1} parent=0 // pred_region
    _
  $region25: #{mlp_forward.1} parent=0 // pred_fallthru
    _
  // Predicated region
  $region26: #{mlp_forward.1} parent=0 // pred_check
    _
  $region27: #{mlp_forward.1} parent=0 // pred_check_branch
    %204 = sbr.rel (0) target = $region29
  $region28: #{mlp_forward.1} parent=0 // pred_region
    _
  $region29: #{mlp_forward.1} parent=0 // pred_fallthru
    _

</llo_original>
